<compile_context>
chip_gen: v6e
topology: v6e:2x2x1
jax: 0.10.0
libtpu: 0.0.40
codegen_flags: <defaults>
</compile_context>

<pallas_src>
import jax
import jax.numpy as jnp
from jax.experimental import pallas as pl
from jax.experimental.pallas import tpu as pltpu

IN_FEAT = 4        # CartPole-v1 observation dim
HIDDEN = 65
N_ACTIONS = 2      # CartPole-v1 action space

H_PAD = 128        # hidden padded to one full lane vector (65 -> 128, zeros)
OUT_PAD = 128      # w2/b2 padded lane-dense for the MXU (2 -> 128, zero columns)
BATCH_TILE = 512   # batch rows per grid step (>=2 tiles lets v7x use both TCs)


def _q_tile(x, w1, b1, w2, b2):
    """Compute Q for one batch tile. Returns (Bt, OUT_PAD) f32; lanes >= N_ACTIONS are 0."""
    # Layer 1 as 4 VPU FMAs: a K=4 matmul would massively underfill the MXU.
    h = b1                                            # (1, H_PAD) broadcasts over batch
    h = h + x[:, 0:1] * w1[0:1, :]
    h = h + x[:, 1:2] * w1[1:2, :]
    h = h + x[:, 2:3] * w1[2:3, :]
    h = h + x[:, 3:4] * w1[3:4, :]
    h = jnp.tanh(h)                                   # padded lanes: tanh(0) = 0
    # Layer 2 on the MXU (128x128, f32 accumulate). Padded output lanes are 0.
    return jnp.dot(h, w2, preferred_element_type=jnp.float32) + b2


def _q_kernel(x_ref, w1_ref, b1_ref, w2_ref, b2_ref, q_ref):
    """Forward kernel (training path): store only the real N_ACTIONS lanes."""
    q = _q_tile(x_ref[...], w1_ref[...], b1_ref[...], w2_ref[...], b2_ref[...])
    q_ref[...] = q[:, :N_ACTIONS]                     # narrow (Bt, 2) store -> tiny HBM writeback


def _act_kernel(x_ref, w1_ref, b1_ref, w2_ref, b2_ref, a_ref):
    """act() kernel: fused argmax; only int32 actions leave the kernel (no Q output)."""
    q = _q_tile(x_ref[...], w1_ref[...], b1_ref[...], w2_ref[...], b2_ref[...])
    # Padded Q lanes are exactly 0 and could beat negative Q values -> mask them.
    lane = jax.lax.broadcasted_iota(jnp.int32, q.shape, 1)
    valid = lane < N_ACTIONS
    qm = jnp.where(valid, q, -jnp.inf)
    qmax = jnp.max(qm, axis=-1, keepdims=True)
    # First-occurrence tie-break (matches torch.argmax).
    first_max = jnp.where((qm >= qmax) & valid, lane, OUT_PAD).astype(jnp.float32)
    a_ref[...] = jnp.min(first_max, axis=-1, keepdims=True).astype(jnp.int32)


def _forward_padded(x_pad, w1p, b1p, w2p, b2p):
    """x_pad: (B_pad, IN_FEAT) f32 -> Q (B_pad, N_ACTIONS) f32."""
    b_pad = x_pad.shape[0]
    out_shape = jax.ShapeDtypeStruct((b_pad, N_ACTIONS), jnp.float32)

    if b_pad <= BATCH_TILE:
        # Small / inference batch: grid-less, whole-array VMEM blocks, no
        # pipeline bookkeeping.
        return pl.pallas_call(
            _q_kernel,
            out_shape=out_shape,
            in_specs=[pl.BlockSpec(memory_space=pltpu.MemorySpace.VMEM)] * 5,
            out_specs=pl.BlockSpec(memory_space=pltpu.MemorySpace.VMEM),
        )(x_pad, w1p, b1p, w2p, b2p)

    # Large batch: tile the batch axis, keep weights resident as whole-array
    # blocks, mark the axis "parallel" so v7x can shard across both TCs.
    grid = (b_pad // BATCH_TILE,)
    return pl.pallas_call(
        _q_kernel,
        out_shape=out_shape,
        grid_spec=pltpu.PrefetchScalarGridSpec(
            num_scalar_prefetch=0,
            grid=grid,
            in_specs=[
                pl.BlockSpec((BATCH_TILE, IN_FEAT), lambda i: (i, 0)),
                pl.BlockSpec((IN_FEAT, H_PAD), lambda i: (0, 0)),
                pl.BlockSpec((1, H_PAD), lambda i: (0, 0)),
                pl.BlockSpec((H_PAD, OUT_PAD), lambda i: (0, 0)),
                pl.BlockSpec((1, OUT_PAD), lambda i: (0, 0)),
            ],
            out_specs=pl.BlockSpec((BATCH_TILE, N_ACTIONS), lambda i: (i, 0)),
        ),
        compiler_params=pltpu.CompilerParams(
            dimension_semantics=("parallel",),
            vmem_limit_bytes=16 * 1024 * 1024,  # per-tile footprint is only ~1-2 MiB
        ),
    )(x_pad, w1p, b1p, w2p, b2p)


@jax.jit
def network_forward(x, padded_params):
    """Forward pass of Network. x: (B, IN_FEAT) -> Q values (B, N_ACTIONS) f32.

    jit'ed: pad + pallas_call + batch-slice are a single fused executable;
    the slice only touches the narrow (B, 2) output (no second wide pass).
    """
    b = x.shape[0]
    mult = BATCH_TILE if b > BATCH_TILE else 8
    b_pad = ((b + mult - 1) // mult) * mult
    x_pad = jnp.pad(x.astype(jnp.float32), ((0, b_pad - b), (0, 0)))
    q = _forward_padded(x_pad, *padded_params)
    return q[:b]


@jax.jit
def _act_device(obs, padded_params):
    """Device part of act(): pad obs, run the argmax kernel, return one int32."""
    x_pad = jnp.zeros((8, IN_FEAT), jnp.float32).at[0].set(obs.astype(jnp.float32))
    a = pl.pallas_call(
        _act_kernel,
        out_shape=jax.ShapeDtypeStruct((8, 1), jnp.int32),
        in_specs=[pl.BlockSpec(memory_space=pltpu.MemorySpace.VMEM)] * 5,
        out_specs=pl.BlockSpec(memory_space=pltpu.MemorySpace.VMEM),
    )(x_pad, *padded_params)
    return a[0, 0]


def act(obs, padded_params):
    """Equivalent of Network.act: argmax_a Q(obs, a) for a single observation.

    One jitted dispatch; only a single int32 crosses to the host (the host
    sync via int(...) is inherent to stepping a Python environment).
    """
    return int(_act_device(obs, padded_params))


def init_params(key):
    """Deterministic init matching nn.Linear's default U(-1/sqrt(fan_in), 1/sqrt(fan_in))."""
    k1, k2, k3, k4 = jax.random.split(key, 4)
    bound1 = 1.0 / jnp.sqrt(jnp.float32(IN_FEAT))
    bound2 = 1.0 / jnp.sqrt(jnp.float32(HIDDEN))
    # Stored as (in, out) so the forward pass is x @ W (PyTorch stores (out, in), does x @ W.T).
    w1 = jax.random.uniform(k1, (IN_FEAT, HIDDEN), jnp.float32, -bound1, bound1)
    b1 = jax.random.uniform(k2, (1, HIDDEN), jnp.float32, -bound1, bound1)
    w2 = jax.random.uniform(k3, (HIDDEN, N_ACTIONS), jnp.float32, -bound2, bound2)
    b2 = jax.random.uniform(k4, (1, N_ACTIONS), jnp.float32, -bound2, bound2)
    return w1, b1, w2, b2


def pad_params(params):
    """Zero-pad params once into the kernel's lane-dense layout (outside the hot path)."""
    w1, b1, w2, b2 = params
    w1p = jnp.zeros((IN_FEAT, H_PAD), jnp.float32).at[:, :HIDDEN].set(w1)
    b1p = jnp.zeros((1, H_PAD), jnp.float32).at[:, :HIDDEN].set(b1)
    w2p = jnp.zeros((H_PAD, OUT_PAD), jnp.float32).at[:HIDDEN, :N_ACTIONS].set(w2)
    b2p = jnp.zeros((1, OUT_PAD), jnp.float32).at[:, :N_ACTIONS].set(b2)
    return w1p, b1p, w2p, b2p


if __name__ == "__main__":
    key = jax.random.PRNGKey(0)
    pkey, xkey, xkey2, xkey3 = jax.random.split(key, 4)
    params = init_params(pkey)
    pparams = pad_params(params)
    w1, b1, w2, b2 = params

    # --- small (inference-sized) batch: grid-less path -----------------------
    batch = 8
    x = jax.random.normal(xkey, (batch, IN_FEAT), jnp.float32)
    q_vals = network_forward(x, pparams)
    jax.block_until_ready(q_vals)

    ref = jnp.tanh(x @ w1 + b1) @ w2 + b2
    assert q_vals.shape == (batch, N_ACTIONS)
    assert jnp.allclose(q_vals, ref, atol=1e-5, rtol=1e-5)

    # act() path: fused in-kernel argmax, single scalar host transfer.
    a0 = act(x[0], pparams)
    assert a0 == int(jnp.argmax(ref[0]))

    # --- ragged small batch (exercises batch padding + slicing) --------------
    xr = jax.random.normal(xkey3, (37, IN_FEAT), jnp.float32)
    qr = network_forward(xr, pparams)
    jax.block_until_ready(qr)
    refr = jnp.tanh(xr @ w1 + b1) @ w2 + b2
    assert qr.shape == (37, N_ACTIONS)
    assert jnp.allclose(qr, refr, atol=1e-5, rtol=1e-5)

    # --- large (training-sized) batch: tiled, parallel batch grid axis -------
    big_batch = 2048
    xb = jax.random.normal(xkey2, (big_batch, IN_FEAT), jnp.float32)
    qb = network_forward(xb, pparams)
    jax.block_until_ready(qb)
    refb = jnp.tanh(xb @ w1 + b1) @ w2 + b2
    assert qb.shape == (big_batch, N_ACTIONS)
    assert jnp.allclose(qb, refb, atol=1e-5, rtol=1e-5)

    # TODO(synk): gym environment interaction / replay-buffer training loop is
    # host-side control flow and intentionally not part of the kernel.
    print("KERNEL_OK")
</pallas_src>

<mosaic_0001>
module attributes {stable_mosaic.version = 11 : i64} {
  func.func @_q_kernel(%arg0: memref<8x4xf32, #tpu.memory_space<vmem>>, %arg1: memref<4x128xf32, #tpu.memory_space<vmem>>, %arg2: memref<1x128xf32, #tpu.memory_space<vmem>>, %arg3: memref<128x128xf32, #tpu.memory_space<vmem>>, %arg4: memref<1x128xf32, #tpu.memory_space<vmem>>, %arg5: memref<8x2xf32, #tpu.memory_space<vmem>>) attributes {dimension_semantics = [], scalar_prefetch = 0 : i64, scratch_operands = 0 : i64, tpu.core_type = #tpu.core_type<tc>} {
    %c0 = arith.constant 0 : index
    %c0_0 = arith.constant 0 : index
    %0 = vector.load %arg0[%c0, %c0_0] : memref<8x4xf32, #tpu.memory_space<vmem>>, vector<8x4xf32>
    %c0_1 = arith.constant 0 : index
    %c0_2 = arith.constant 0 : index
    %1 = vector.load %arg1[%c0_1, %c0_2] : memref<4x128xf32, #tpu.memory_space<vmem>>, vector<4x128xf32>
    %c0_3 = arith.constant 0 : index
    %c0_4 = arith.constant 0 : index
    %2 = vector.load %arg2[%c0_3, %c0_4] : memref<1x128xf32, #tpu.memory_space<vmem>>, vector<1x128xf32>
    %c0_5 = arith.constant 0 : index
    %c0_6 = arith.constant 0 : index
    %3 = vector.load %arg3[%c0_5, %c0_6] : memref<128x128xf32, #tpu.memory_space<vmem>>, vector<128x128xf32>
    %c0_7 = arith.constant 0 : index
    %c0_8 = arith.constant 0 : index
    %4 = vector.load %arg4[%c0_7, %c0_8] : memref<1x128xf32, #tpu.memory_space<vmem>>, vector<1x128xf32>
    %5 = vector.extract_strided_slice %0 {offsets = [0, 0], sizes = [8, 1], strides = [1, 1]} : vector<8x4xf32> to vector<8x1xf32>
    %6 = vector.extract_strided_slice %1 {offsets = [0, 0], sizes = [1, 128], strides = [1, 1]} : vector<4x128xf32> to vector<1x128xf32>
    %7 = vector.broadcast %5 : vector<8x1xf32> to vector<8x128xf32>
    %8 = vector.broadcast %6 : vector<1x128xf32> to vector<8x128xf32>
    %9 = arith.mulf %7, %8 : vector<8x128xf32>
    %10 = vector.broadcast %2 : vector<1x128xf32> to vector<8x128xf32>
    %11 = arith.addf %10, %9 : vector<8x128xf32>
    %12 = vector.extract_strided_slice %0 {offsets = [0, 1], sizes = [8, 1], strides = [1, 1]} : vector<8x4xf32> to vector<8x1xf32>
    %13 = vector.extract_strided_slice %1 {offsets = [1, 0], sizes = [1, 128], strides = [1, 1]} : vector<4x128xf32> to vector<1x128xf32>
    %14 = vector.broadcast %12 : vector<8x1xf32> to vector<8x128xf32>
    %15 = vector.broadcast %13 : vector<1x128xf32> to vector<8x128xf32>
    %16 = arith.mulf %14, %15 : vector<8x128xf32>
    %17 = arith.addf %11, %16 : vector<8x128xf32>
    %18 = vector.extract_strided_slice %0 {offsets = [0, 2], sizes = [8, 1], strides = [1, 1]} : vector<8x4xf32> to vector<8x1xf32>
    %19 = vector.extract_strided_slice %1 {offsets = [2, 0], sizes = [1, 128], strides = [1, 1]} : vector<4x128xf32> to vector<1x128xf32>
    %20 = vector.broadcast %18 : vector<8x1xf32> to vector<8x128xf32>
    %21 = vector.broadcast %19 : vector<1x128xf32> to vector<8x128xf32>
    %22 = arith.mulf %20, %21 : vector<8x128xf32>
    %23 = arith.addf %17, %22 : vector<8x128xf32>
    %24 = vector.extract_strided_slice %0 {offsets = [0, 3], sizes = [8, 1], strides = [1, 1]} : vector<8x4xf32> to vector<8x1xf32>
    %25 = vector.extract_strided_slice %1 {offsets = [3, 0], sizes = [1, 128], strides = [1, 1]} : vector<4x128xf32> to vector<1x128xf32>
    %26 = vector.broadcast %24 : vector<8x1xf32> to vector<8x128xf32>
    %27 = vector.broadcast %25 : vector<1x128xf32> to vector<8x128xf32>
    %28 = arith.mulf %26, %27 : vector<8x128xf32>
    %29 = arith.addf %23, %28 : vector<8x128xf32>
    %30 = math.tanh %29 : vector<8x128xf32>
    %cst = arith.constant dense<0.000000e+00> : vector<8x128xf32>
    %31 = tpu.matmul %30, %3, %cst {dimension_numbers = #tpu.dot_dimension_numbers<[1], [0], [0], [1], [0, 0, 1, 1], [], []>} : vector<8x128xf32>, vector<128x128xf32>, vector<8x128xf32> -> vector<8x128xf32>
    %32 = vector.broadcast %4 : vector<1x128xf32> to vector<8x128xf32>
    %33 = arith.addf %31, %32 : vector<8x128xf32>
    %34 = vector.extract_strided_slice %33 {offsets = [0, 0], sizes = [8, 2], strides = [1, 1]} : vector<8x128xf32> to vector<8x2xf32>
    %c0_9 = arith.constant 0 : index
    %c0_10 = arith.constant 0 : index
    %35 = vector.load %arg5[%c0_9, %c0_10] : memref<8x2xf32, #tpu.memory_space<vmem>>, vector<8x2xf32>
    tpu.vector_store %arg5[%c0_9, %c0_10], %34 {strides = array<i32>} : memref<8x2xf32, #tpu.memory_space<vmem>>, vector<8x2xf32>,
    return
  }
}

</mosaic_0001>

<llo_original>
// kernel: network_forward.1
$region0: #{network_forward.1}
  #allocation0 [shape = 'u32[]', space=smem, size = 0x4, offset = 0x4, fixed_abs, tag = 'smem constant byte address 0x4 - core index']
  #allocation1 [shape = 'u32[144,128]{1,0:T(1,128)}', space=vmem, size = 0x12000, scoped, tag = 'internal scratch']
  %s0 = inlined_call_operand.vmem [shape: f32[8,4], index: 0, kind: input, shape index: {}]
  %s1 = inlined_call_operand.vmem [shape: f32[4,128], index: 1, kind: input, shape index: {}]
  %s2 = inlined_call_operand.vmem [shape: f32[1,128], index: 2, kind: input, shape index: {}]
  %s3 = inlined_call_operand.hbm [shape: f32[128,128], index: 3, kind: input, shape index: {}]
  %s4 = inlined_call_operand.vmem [shape: f32[1,128], index: 4, kind: input, shape index: {}]
  %s5 = inlined_call_operand.vmem [shape: f32[8,2], index: 5, kind: output, shape index: {}]
  %s6 = sld [smem:[#allocation0]]
  $region34: #{network_forward.1} parent=0
    _
  %s8 = ssub.s32 1, %s6
  %s9 = scalar_select 0, %s8, %s6
  $region1: #{network_forward.1} parent=0
    #allocation2 [shape = 'u8[65536]{0}', space=vmem, size = 0x10000, scoped, tag = 'input window, operand 3, single buffered']
    #allocation3 [shape = 's32[1]{0}', space=sflag, size = 0x4, scoped, tag = 'scoped memory for network_forward.1']
    %10 = vsyncpa [#allocation3], 0
    // Predicated region
    $region2: #{network_forward.1} parent=1 // pred_check
      _
    $region3: #{network_forward.1} parent=1 // pred_check_branch
      %12 = sbr.rel (0) target = $region5
    $region4: #{network_forward.1} parent=1 // pred_region
      _
    $region5: #{network_forward.1} parent=1 // pred_fallthru
      _
    // Predicated region
    $region6: #{network_forward.1} parent=1 // pred_check
      _
    $region7: #{network_forward.1} parent=1 // pred_check_branch
      %14 = sbr.rel (0) target = $region9
    $region8: #{network_forward.1} parent=1 // pred_region
      _
    $region9: #{network_forward.1} parent=1 // pred_fallthru
      _
    // Predicated region
    $region10: #{network_forward.1} parent=1 // pred_check
      _
    $region11: #{network_forward.1} parent=1 // pred_check_branch
      %16 = sbr.rel (0) target = $region13
    $region12: #{network_forward.1} parent=1 // pred_region
      _
    $region13: #{network_forward.1} parent=1 // pred_fallthru
      _
    // Predicated region
    $region14: #{network_forward.1} parent=1 // pred_check
      _
    $region15: #{network_forward.1} parent=1 // pred_check_branch
      %18 = sbr.rel (0) target = $region17
    $region16: #{network_forward.1} parent=1 // pred_region
      %s20 = ssub.s32 2048, 2048
      %21 = vsyncadd [#allocation3], %s20
      %s22 = sshll.u32 [#allocation2], 4
      %s23 = int_to_ptr.vmem [resolvable:$true] %s22
      %28 = dma.hbm_to_vmem [thread:$0]  %s3, 2048, %s23, [#allocation3], 128, 128, 8
    $region17: #{network_forward.1} parent=1 // pred_fallthru
      _
    // Predicated region
    $region18: #{network_forward.1} parent=1 // pred_check
      _
    $region19: #{network_forward.1} parent=1 // pred_check_branch
      %30 = sbr.rel (0) target = $region21
    $region20: #{network_forward.1} parent=1 // pred_region
      _
    $region21: #{network_forward.1} parent=1 // pred_fallthru
      _
    // Predicated region
    $region22: #{network_forward.1} parent=1 // pred_check
      _
    $region23: #{network_forward.1} parent=1 // pred_check_branch
      %32 = sbr.rel (0) target = $region25
    $region24: #{network_forward.1} parent=1 // pred_region
      %33 = dma.done [#allocation3], 2048
    $region25: #{network_forward.1} parent=1 // pred_fallthru
      _
    %v34 = vld [vmem:[%s0] sm:$0xff]
    %v35 = vld [vmem:[%s1] sm:$0xf]
    %v36 = vld [vmem:[%s2] sm:$0x1]
    %v37 = vld [vmem:[#allocation2] sm:$0xff]
    %v38 = vld [vmem:[#allocation2 + $0x8] sm:$0xff]
    %v39 = vld [vmem:[#allocation2 + $0x10] sm:$0xff]
    %v40 = vld [vmem:[#allocation2 + $0x18] sm:$0xff]
    %v41 = vld [vmem:[#allocation2 + $0x20] sm:$0xff]
    %v42 = vld [vmem:[#allocation2 + $0x28] sm:$0xff]
    %v43 = vld [vmem:[#allocation2 + $0x30] sm:$0xff]
    %v44 = vld [vmem:[#allocation2 + $0x38] sm:$0xff]
    %v45 = vld [vmem:[#allocation2 + $0x40] sm:$0xff]
    %v46 = vld [vmem:[#allocation2 + $0x48] sm:$0xff]
    %v47 = vld [vmem:[#allocation2 + $0x50] sm:$0xff]
    %v48 = vld [vmem:[#allocation2 + $0x58] sm:$0xff]
    %v49 = vld [vmem:[#allocation2 + $0x60] sm:$0xff]
    %v50 = vld [vmem:[#allocation2 + $0x68] sm:$0xff]
    %v51 = vld [vmem:[#allocation2 + $0x70] sm:$0xff]
    %v52 = vld [vmem:[#allocation2 + $0x78] sm:$0xff]
    %v53 = vld [vmem:[%s4] sm:$0x1]
    %55 = vset.pattern.permute.xlu0 0
    %56 = vperm.xlu0 %55, %v34
    %v57 = vpop.permute.xlu0 %56
    %v59 = vlaneseq
    %v60 = vshrl.u32 %v59, 7
    %v61 = vsub.s32 0, %v60
    %v62 = vrot.slane %v35, %v61
    %v63 = vmul.f32 %v57, %v62
    %v65 = vlaneseq
    %v66 = vshrl.u32 %v65, 7
    %v67 = vsub.s32 0, %v66
    %v68 = vrot.slane %v36, %v67
    %v70 = vadd.f32 %v68, %v63
    %71 = vset.pattern.permute.xlu0 1
    %72 = vperm.xlu0 %71, %v34
    %v73 = vpop.permute.xlu0 %72
    %v75 = vlaneseq
    %v76 = vshrl.u32 %v75, 7
    %v77 = vsub.s32 1, %v76
    %v78 = vrot.slane %v35, %v77
    %v79 = vmul.f32 %v73, %v78
    %v80 = vadd.f32 %v70, %v79
    %81 = vset.pattern.permute.xlu0 2
    %82 = vperm.xlu0 %81, %v34
    %v83 = vpop.permute.xlu0 %82
    %v85 = vlaneseq
    %v86 = vshrl.u32 %v85, 7
    %v87 = vsub.s32 2, %v86
    %v88 = vrot.slane %v35, %v87
    %v89 = vmul.f32 %v83, %v88
    %v90 = vadd.f32 %v80, %v89
    %91 = vset.pattern.permute.xlu0 3
    %92 = vperm.xlu0 %91, %v34
    %v93 = vpop.permute.xlu0 %92
    %v95 = vlaneseq
    %v96 = vshrl.u32 %v95, 7
    %v97 = vsub.s32 3, %v96
    %v98 = vrot.slane %v35, %v97
    %v99 = vmul.f32 %v93, %v98
    %v100 = vadd.f32 %v90, %v99
    %v101 = vtanh.pop %v100
    %v103 = vlaneseq
    %v104 = vshrl.u32 %v103, 7
    %v105 = vsub.s32 0, %v104
    %v106 = vrot.slane %v53, %v105
    %108 = vmatprep.subr.mxu0 0.0
    %109 = vmatpush1.msra.mxu0 %v52
    %110 = vmatprep.subr.mxu0 0.0
    %111 = vmatpush1.msra.mxu0 %v51
    %112 = vmatprep.subr.mxu0 0.0
    %113 = vmatpush1.msra.mxu0 %v50
    %114 = vmatprep.subr.mxu0 0.0
    %115 = vmatpush1.msra.mxu0 %v49
    %116 = vmatprep.subr.mxu0 0.0
    %117 = vmatpush1.msra.mxu0 %v48
    %118 = vmatprep.subr.mxu0 0.0
    %119 = vmatpush1.msra.mxu0 %v47
    %120 = vmatprep.subr.mxu0 0.0
    %121 = vmatpush1.msra.mxu0 %v46
    %122 = vmatprep.subr.mxu0 0.0
    %123 = vmatpush1.msra.mxu0 %v45
    %124 = vmatprep.subr.mxu0 0.0
    %125 = vmatpush1.msra.mxu0 %v44
    %126 = vmatprep.subr.mxu0 0.0
    %127 = vmatpush1.msra.mxu0 %v43
    %128 = vmatprep.subr.mxu0 0.0
    %129 = vmatpush1.msra.mxu0 %v42
    %130 = vmatprep.subr.mxu0 0.0
    %131 = vmatpush1.msra.mxu0 %v41
    %132 = vmatprep.subr.mxu0 0.0
    %133 = vmatpush1.msra.mxu0 %v40
    %134 = vmatprep.subr.mxu0 0.0
    %135 = vmatpush1.msra.mxu0 %v39
    %136 = vmatprep.subr.mxu0 0.0
    %137 = vmatpush1.msra.mxu0 %v38
    %138 = vmatprep.subr.mxu0 0.0
    %139 = vmatpush1.msra.mxu0 %v37
    %140 = vmatprep.subr.mxu0 0.0
    %141 = vmatpush2.msra.mxu0 0.0
    %142 = vmatprep.subr.mxu0 0.0
    %143 = vmatpush2.msra.mxu0 0.0
    %144 = vmatprep.subr.mxu0 0.0
    %145 = vmatpush2.msra.mxu0 0.0
    %146 = vmatprep.subr.mxu0 0.0
    %147 = vmatpush2.msra.mxu0 0.0
    %148 = vmatprep.subr.mxu0 0.0
    %149 = vmatpush2.msra.mxu0 0.0
    %150 = vmatprep.subr.mxu0 0.0
    %151 = vmatpush2.msra.mxu0 0.0
    %152 = vmatprep.subr.mxu0 0.0
    %153 = vmatpush2.msra.mxu0 0.0
    %154 = vmatprep.subr.mxu0 0.0
    %155 = vmatpush2.msra.mxu0 0.0
    %156 = vmatprep.subr.mxu0 0.0
    %157 = vmatpush2.msra.mxu0 0.0
    %158 = vmatprep.subr.mxu0 0.0
    %159 = vmatpush2.msra.mxu0 0.0
    %160 = vmatprep.subr.mxu0 0.0
    %161 = vmatpush2.msra.mxu0 0.0
    %162 = vmatprep.subr.mxu0 0.0
    %163 = vmatpush2.msra.mxu0 0.0
    %164 = vmatprep.subr.mxu0 0.0
    %165 = vmatpush2.msra.mxu0 0.0
    %166 = vmatprep.subr.mxu0 0.0
    %167 = vmatpush2.msra.mxu0 0.0
    %168 = vmatprep.subr.mxu0 0.0
    %169 = vmatpush2.msra.mxu0 0.0
    %170 = vmatprep.subr.mxu0 0.0
    %171 = vmatpush2.msra.mxu0 0.0
    %172 = vmatprep.mubr.f32.mxu0 0.0
    %173 = vmatmul.mubr.f32.gmra.mxu0 %v101
    %v174 = vpop.f32.mrf.mxu0
    %v175 = vadd.f32 %v106, %v174
    %v176 = vpop.f32.mrf.mxu0
    %177 = vdwg.mxu0
    %vm178 = vcmask 15360
    %179 = vst.msk [vmem:[%s5] sm:$0xff] %vm178, %v175
    // Predicated region
    $region26: #{network_forward.1} parent=1 // pred_check
      _
    $region27: #{network_forward.1} parent=1 // pred_check_branch
      %181 = sbr.rel (0) target = $region29
    $region28: #{network_forward.1} parent=1 // pred_region
      _
    $region29: #{network_forward.1} parent=1 // pred_fallthru
      _
    // Predicated region
    $region30: #{network_forward.1} parent=1 // pred_check
      _
    $region31: #{network_forward.1} parent=1 // pred_check_branch
      %183 = sbr.rel (0) target = $region33
    $region32: #{network_forward.1} parent=1 // pred_region
      _
    $region33: #{network_forward.1} parent=1 // pred_fallthru
      _
    %184 = vsyncpa [#allocation3], 1

</llo_original>
